<compile_context>
chip_gen: v7x
topology: tpu7x:2x2x1
jax: 0.10.0
libtpu: 0.0.40
codegen_flags: <defaults>
</compile_context>

<pallas_src>
import math
import functools

import jax
import jax.numpy as jnp
from jax.experimental import pallas as pl
from jax.experimental.pallas import tpu as pltpu


# ----------------------------------------------------------------------------
# Parameter / buffer setup (glue, plain JAX): sinusoidal table [max_len, 1, D]
# (same layout as the registered torch buffer).
# ----------------------------------------------------------------------------
def make_positional_encoding(d_model: int, max_len: int = 5000) -> jnp.ndarray:
    position = jnp.arange(max_len, dtype=jnp.float32)[:, None]          # [L, 1]
    div_term = jnp.exp(
        jnp.arange(0, d_model, 2, dtype=jnp.float32)
        * (-math.log(10000.0) / d_model)
    )                                                                    # [D/2]
    pe = jnp.zeros((max_len, d_model), dtype=jnp.float32)
    pe = pe.at[:, 0::2].set(jnp.sin(position * div_term))
    pe = pe.at[:, 1::2].set(jnp.cos(position * div_term))
    return pe[:, None, :]                                                # [L, 1, D]


# ----------------------------------------------------------------------------
# Pallas kernels
# ----------------------------------------------------------------------------
def _pe_add_kernel(x_ref, pe_ref, o_ref):
    # x: (ts, B, D), pe: (ts, 1, D) -> implicit (stride-0) broadcast over batch.
    o_ref[...] = x_ref[...] + pe_ref[...]


def _pe_add_dropout_kernel(x_ref, pe_ref, bits_ref, o_ref, *,
                           keep_threshold: int, inv_keep: float):
    # Inverted dropout after the positional add.  bits are precomputed uint32;
    # keep with prob (1 - p)  <=>  bits >= round(p * 2^32)  (integer compare,
    # no float conversion; threshold clamp biases keep-prob by < 2^-32).
    y = x_ref[...] + pe_ref[...]
    keep = bits_ref[...] >= jnp.uint32(keep_threshold)
    o_ref[...] = jnp.where(keep, y * inv_keep, jnp.zeros_like(y))


# ----------------------------------------------------------------------------
# Generation-aware budgets and cdiv tile picking
# ----------------------------------------------------------------------------
def _vmem_budgets() -> tuple[int, int]:
    """Returns (x-tile byte budget, vmem_limit_bytes)."""
    try:
        cap = pltpu.get_tpu_info().vmem_capacity_bytes
    except Exception:
        cap = 64 * 1024 * 1024                       # conservative (v7x-sized)
    if cap >= 128 * 1024 * 1024:                     # v5e / v6e: 128 MiB VMEM
        # double-buffered worst case ~ 2*(x + bits + out) ~ 6 * budget = 48 MiB
        return 8 * 1024 * 1024, 96 * 1024 * 1024
    # v7x: 64 MiB per TensorCore
    return 4 * 1024 * 1024, 40 * 1024 * 1024


def _pick_seq_tile(S: int, B: int, D: int, itemsize: int,
                   budget_bytes: int) -> int:
    row_bytes = max(B * D * itemsize, 1)
    ts = max(1, budget_bytes // row_bytes)
    return min(ts, S)


# ----------------------------------------------------------------------------
# Wrapper
# ----------------------------------------------------------------------------
def positional_encoding_forward(
    x: jnp.ndarray,            # [seq_len, batch, d_model]
    pe: jnp.ndarray,           # [max_len, 1, d_model]
    *,
    dropout_p: float = 0.1,
    training: bool = False,
    rng_key=None,
    dropout_bits: jnp.ndarray | None = None,   # optional precomputed uint32 bits
    seq_tile: int | None = None,
) -> jnp.ndarray:
    S, B, D = x.shape
    assert 0.0 <= dropout_p < 1.0
    pe_slice = pe[:S].astype(x.dtype)                    # (S, 1, D)

    tile_budget, vmem_limit = _vmem_budgets()
    if seq_tile is None:
        ts = _pick_seq_tile(S, B, D, x.dtype.itemsize, tile_budget)
    else:
        ts = seq_tile
    ts = max(1, min(ts, S))
    grid = (pl.cdiv(S, ts),)                             # ragged tail OK

    # Last two block dims equal the full array dims (B, D) for x/out, and
    # (1, D) for pe -> the (8,128) block constraint is never violated.
    # NOTE: if B < sublane pack or D < 128, vregs are padded (correct but
    # layout-suboptimal); typical transformer shapes (B>=8, D%128==0) are dense.
    x_spec = pl.BlockSpec((ts, B, D), lambda i: (i, 0, 0))
    pe_spec = pl.BlockSpec((ts, 1, D), lambda i: (i, 0, 0))
    out_spec = pl.BlockSpec((ts, B, D), lambda i: (i, 0, 0))
    out_shape = jax.ShapeDtypeStruct((S, B, D), x.dtype)

    compiler_params = pltpu.CompilerParams(
        dimension_semantics=("parallel",),               # seq tiles independent
        vmem_limit_bytes=vmem_limit,
    )

    n_elem = S * B * D

    if (not training) or dropout_p == 0.0:
        # Dropout is identity in eval mode (matches nn.Dropout.eval()).
        cost = pl.CostEstimate(
            flops=n_elem, transcendentals=0,
            bytes_accessed=(2 * n_elem + S * D) * x.dtype.itemsize)
        return pl.pallas_call(
            _pe_add_kernel,
            out_shape=out_shape,
            grid=grid,
            in_specs=[x_spec, pe_spec],
            out_specs=out_spec,
            compiler_params=compiler_params,
            cost_estimate=cost,
        )(x, pe_slice)

    if dropout_bits is None:
        if rng_key is None:
            rng_key = jax.random.PRNGKey(0)
        dropout_bits = jax.random.bits(rng_key, (S, B, D), dtype=jnp.uint32)
    keep_threshold = min(int(round(dropout_p * float(2 ** 32))), 2 ** 32 - 1)
    inv_keep = 1.0 / (1.0 - dropout_p)
    bits_spec = pl.BlockSpec((ts, B, D), lambda i: (i, 0, 0))

    cost = pl.CostEstimate(
        flops=3 * n_elem, transcendentals=0,
        bytes_accessed=(2 * n_elem + S * D) * x.dtype.itemsize + n_elem * 4)
    return pl.pallas_call(
        functools.partial(_pe_add_dropout_kernel,
                          keep_threshold=keep_threshold, inv_keep=inv_keep),
        out_shape=out_shape,
        grid=grid,
        in_specs=[x_spec, pe_spec, bits_spec],
        out_specs=out_spec,
        compiler_params=compiler_params,
        cost_estimate=cost,
    )(x, pe_slice, dropout_bits)


# ----------------------------------------------------------------------------
# Demo / check
# ----------------------------------------------------------------------------
if __name__ == "__main__":
    seq_len, batch, d_model = 8, 2, 32
    max_len = 64
    dropout_p = 0.1

    key = jax.random.PRNGKey(0)
    kx, kbits = jax.random.split(key)
    x = jax.random.normal(kx, (seq_len, batch, d_model), dtype=jnp.float32)
    pe = make_positional_encoding(d_model, max_len)

    # 1) Eval-mode forward (dropout = identity) vs pure-JAX reference.
    y = positional_encoding_forward(x, pe, dropout_p=dropout_p, training=False)
    y = jax.block_until_ready(y)
    y_ref = x + pe[:seq_len].astype(x.dtype)
    assert y.shape == (seq_len, batch, d_model)
    assert jnp.allclose(y, y_ref, atol=1e-6, rtol=1e-6), "eval mismatch"

    # 2) Training-mode forward with explicit precomputed bits -> exact check.
    bits = jax.random.bits(kbits, (seq_len, batch, d_model), dtype=jnp.uint32)
    y_tr = positional_encoding_forward(
        x, pe, dropout_p=dropout_p, training=True, dropout_bits=bits)
    y_tr = jax.block_until_ready(y_tr)
    thr = min(int(round(dropout_p * float(2 ** 32))), 2 ** 32 - 1)
    keep = bits >= jnp.uint32(thr)
    y_tr_ref = jnp.where(keep, y_ref / (1.0 - dropout_p), 0.0)
    assert jnp.allclose(y_tr, y_tr_ref, atol=1e-5, rtol=1e-5), "dropout mismatch"

    # 3) Transformer-shaped case with a ragged cdiv grid (partial last tile).
    S2, B2, D2 = 20, 8, 128
    x2 = jax.random.normal(jax.random.PRNGKey(1), (S2, B2, D2), dtype=jnp.float32)
    pe2 = make_positional_encoding(D2, 64)
    y2 = positional_encoding_forward(x2, pe2, training=False, seq_tile=8)
    y2 = jax.block_until_ready(y2)
    y2_ref = x2 + pe2[:S2].astype(x2.dtype)
    assert jnp.allclose(y2, y2_ref, atol=1e-6, rtol=1e-6), "ragged-tile mismatch"

    print("KERNEL_OK")
</pallas_src>

<mosaic_0001>
module attributes {stable_mosaic.version = 11 : i64} {
  func.func @_pe_add_kernel(%arg0: i32, %arg1: memref<8x2x32xf32, #tpu.memory_space<vmem>>, %arg2: memref<8x1x32xf32, #tpu.memory_space<vmem>>, %arg3: memref<8x2x32xf32, #tpu.memory_space<vmem>>) attributes {dimension_semantics = [#tpu.dimension_semantics<parallel>], iteration_bounds = array<i64: 1>, scalar_prefetch = 0 : i64, scratch_operands = 0 : i64, tpu.core_type = #tpu.core_type<tc>, window_params = [{transform_indices = @transform_0, window_bounds = array<i64: 8, 2, 32>}, {transform_indices = @transform_1, window_bounds = array<i64: 8, 1, 32>}, {transform_indices = @transform_2, window_bounds = array<i64: 8, 2, 32>}]} {
    %c0 = arith.constant 0 : index
    %c0_0 = arith.constant 0 : index
    %c0_1 = arith.constant 0 : index
    %0 = vector.load %arg1[%c0, %c0_0, %c0_1] : memref<8x2x32xf32, #tpu.memory_space<vmem>>, vector<8x2x32xf32>
    %c0_2 = arith.constant 0 : index
    %c0_3 = arith.constant 0 : index
    %c0_4 = arith.constant 0 : index
    %1 = vector.load %arg2[%c0_2, %c0_3, %c0_4] : memref<8x1x32xf32, #tpu.memory_space<vmem>>, vector<8x1x32xf32>
    %2 = vector.broadcast %1 : vector<8x1x32xf32> to vector<8x2x32xf32>
    %3 = arith.addf %0, %2 : vector<8x2x32xf32>
    %c0_5 = arith.constant 0 : index
    %c0_6 = arith.constant 0 : index
    %c0_7 = arith.constant 0 : index
    %4 = vector.load %arg3[%c0_5, %c0_6, %c0_7] : memref<8x2x32xf32, #tpu.memory_space<vmem>>, vector<8x2x32xf32>
    tpu.vector_store %arg3[%c0_5, %c0_6, %c0_7], %3 {strides = array<i32>} : memref<8x2x32xf32, #tpu.memory_space<vmem>>, vector<8x2x32xf32>,
    return
  }
  func.func @transform_0(%arg0: i32) -> (i32, i32, i32) {
    %c0_i32 = arith.constant 0 : i32
    %c0_i32_0 = arith.constant 0 : i32
    %c0_i32_1 = arith.constant 0 : i32
    return %arg0, %c0_i32, %c0_i32_0 : i32, i32, i32
  }
  func.func @transform_1(%arg0: i32) -> (i32, i32, i32) {
    %c0_i32 = arith.constant 0 : i32
    %c0_i32_0 = arith.constant 0 : i32
    %c0_i32_1 = arith.constant 0 : i32
    return %arg0, %c0_i32, %c0_i32_0 : i32, i32, i32
  }
  func.func @transform_2(%arg0: i32) -> (i32, i32, i32) {
    %c0_i32 = arith.constant 0 : i32
    %c0_i32_0 = arith.constant 0 : i32
    %c0_i32_1 = arith.constant 0 : i32
    return %arg0, %c0_i32, %c0_i32_0 : i32, i32, i32
  }
}

</mosaic_0001>

<llo_original>
// kernel: tpu_custom_call.1
$region0: #{tpu_custom_call.1}
  #allocation0 [shape = 'u32[]', space=smem, size = 0x4, offset = 0x4, fixed_abs, tag = 'smem constant byte address 0x4 - core index']
  #allocation1 [shape = 'u32[144,128]{1,0:T(1,128)}', space=vmem, size = 0x12000, scoped, tag = 'internal scratch']
  %s0 = inlined_call_operand.hbm [shape: f32[8,2,32], index: 0, kind: input, shape index: {}]
  %s1 = inlined_call_operand.hbm [shape: f32[8,1,32], index: 1, kind: input, shape index: {}]
  %s2 = inlined_call_operand.hbm [shape: f32[8,2,32], index: 2, kind: output, shape index: {}]
  %s3 = sld [smem:[#allocation0]]
  $region26: #{tpu_custom_call.1} parent=0
    _
  %s5 = ssub.s32 1, %s3
  %s6 = scalar_select 0, %s5, %s3
  $region1: #{tpu_custom_call.1} parent=0
    #allocation2 [shape = 'u8[8192]{0}', space=vmem, size = 0x2000, scoped, tag = 'input window, operand 0, single buffered']
    #allocation3 [shape = 's32[1]{0}', space=sflag, size = 0x4, scoped, tag = 'scoped memory for tpu_custom_call.1']
    #allocation4 [shape = 's32[1]{0}', space=sflag, size = 0x4, scoped, tag = 'scoped memory for tpu_custom_call.1']
    #allocation5 [shape = 'u8[4096]{0}', space=vmem, size = 0x1000, scoped, tag = 'input window, operand 1, single buffered']
    #allocation6 [shape = 's32[1]{0}', space=sflag, size = 0x4, scoped, tag = 'scoped memory for tpu_custom_call.1']
    #allocation7 [shape = 'u8[8192]{0}', space=vmem, size = 0x2000, scoped, tag = 'output window, operand 0, single buffered']
    %7 = vsyncpa [#allocation3], 0
    %8 = vsyncpa [#allocation6], 0
    %9 = vsyncpa [#allocation4], 0
    // Predicated region
    $region2: #{tpu_custom_call.1} parent=1 // pred_check
      _
    $region3: #{tpu_custom_call.1} parent=1 // pred_check_branch
      %11 = sbr.rel (0) target = $region5
    $region4: #{tpu_custom_call.1} parent=1 // pred_region
      %s13 = ssub.s32 256, 256
      %14 = vsyncadd [#allocation3], %s13
      %s15 = sshll.u32 [#allocation2], 4
      %s16 = int_to_ptr.vmem [resolvable:$true] %s15
      %21 = dma.hbm_to_vmem [thread:$0]  %s0, 256, %s16, [#allocation3], 32, 32, 2
    $region5: #{tpu_custom_call.1} parent=1 // pred_fallthru
      _
    // Predicated region
    $region6: #{tpu_custom_call.1} parent=1 // pred_check
      _
    $region7: #{tpu_custom_call.1} parent=1 // pred_check_branch
      %23 = sbr.rel (0) target = $region9
    $region8: #{tpu_custom_call.1} parent=1 // pred_region
      %s25 = ssub.s32 128, 128
      %26 = vsyncadd [#allocation6], %s25
      %s27 = sshll.u32 [#allocation5], 4
      %s28 = int_to_ptr.vmem [resolvable:$true] %s27
      %33 = dma.hbm_to_vmem [thread:$0]  %s1, 128, %s28, [#allocation6], 16, 16, 1
    $region9: #{tpu_custom_call.1} parent=1 // pred_fallthru
      _
    // Predicated region
    $region10: #{tpu_custom_call.1} parent=1 // pred_check
      _
    $region11: #{tpu_custom_call.1} parent=1 // pred_check_branch
      %35 = sbr.rel (0) target = $region13
    $region12: #{tpu_custom_call.1} parent=1 // pred_region
      %36 = dma.done [#allocation3], 256
    $region13: #{tpu_custom_call.1} parent=1 // pred_fallthru
      _
    // Predicated region
    $region14: #{tpu_custom_call.1} parent=1 // pred_check
      _
    $region15: #{tpu_custom_call.1} parent=1 // pred_check_branch
      %38 = sbr.rel (0) target = $region17
    $region16: #{tpu_custom_call.1} parent=1 // pred_region
      %39 = dma.done [#allocation6], 128
    $region17: #{tpu_custom_call.1} parent=1 // pred_fallthru
      _
    %v40 = vld [vmem:[#allocation2] sm:$0x3]
    %v41 = vld [vmem:[#allocation2 + $0x2] sm:$0x3]
    %v42 = vld [vmem:[#allocation2 + $0x4] sm:$0x3]
    %v43 = vld [vmem:[#allocation2 + $0x6] sm:$0x3]
    %v44 = vld [vmem:[#allocation2 + $0x8] sm:$0x3]
    %v45 = vld [vmem:[#allocation2 + $0xa] sm:$0x3]
    %v46 = vld [vmem:[#allocation2 + $0xc] sm:$0x3]
    %v47 = vld [vmem:[#allocation2 + $0xe] sm:$0x3]
    %v48 = vld [vmem:[#allocation5] sm:$0x1]
    %v49 = vld [vmem:[#allocation5 + $0x1] sm:$0x1]
    %v50 = vld [vmem:[#allocation5 + $0x2] sm:$0x1]
    %v51 = vld [vmem:[#allocation5 + $0x3] sm:$0x1]
    %v52 = vld [vmem:[#allocation5 + $0x4] sm:$0x1]
    %v53 = vld [vmem:[#allocation5 + $0x5] sm:$0x1]
    %v54 = vld [vmem:[#allocation5 + $0x6] sm:$0x1]
    %v55 = vld [vmem:[#allocation5 + $0x7] sm:$0x1]
    %v64 = vlaneseq
    %v65 = vshrl.u32 %v64, 7
    %v66 = vsub.s32 0, %v65
    %v67 = vrot.slane %v48, %v66
    %v68 = vlaneseq
    %v69 = vshrl.u32 %v68, 7
    %v70 = vsub.s32 0, %v69
    %v71 = vrot.slane %v49, %v70
    %v72 = vlaneseq
    %v73 = vshrl.u32 %v72, 7
    %v74 = vsub.s32 0, %v73
    %v75 = vrot.slane %v50, %v74
    %v76 = vlaneseq
    %v77 = vshrl.u32 %v76, 7
    %v78 = vsub.s32 0, %v77
    %v79 = vrot.slane %v51, %v78
    %v80 = vlaneseq
    %v81 = vshrl.u32 %v80, 7
    %v82 = vsub.s32 0, %v81
    %v83 = vrot.slane %v52, %v82
    %v84 = vlaneseq
    %v85 = vshrl.u32 %v84, 7
    %v86 = vsub.s32 0, %v85
    %v87 = vrot.slane %v53, %v86
    %v88 = vlaneseq
    %v89 = vshrl.u32 %v88, 7
    %v90 = vsub.s32 0, %v89
    %v91 = vrot.slane %v54, %v90
    %v92 = vlaneseq
    %v93 = vshrl.u32 %v92, 7
    %v94 = vsub.s32 0, %v93
    %v95 = vrot.slane %v55, %v94
    %v104 = vadd.f32 %v40, %v67
    %v105 = vadd.f32 %v41, %v71
    %v106 = vadd.f32 %v42, %v75
    %v107 = vadd.f32 %v43, %v79
    %v108 = vadd.f32 %v44, %v83
    %v109 = vadd.f32 %v45, %v87
    %v110 = vadd.f32 %v46, %v91
    %v111 = vadd.f32 %v47, %v95
    %vm112 = vcmask 254976
    %113 = vst.msk [vmem:[#allocation7] sm:$0x3] %vm112, %v104
    %114 = vst.msk [vmem:[#allocation7 + $0x2] sm:$0x3] %vm112, %v105
    %115 = vst.msk [vmem:[#allocation7 + $0x4] sm:$0x3] %vm112, %v106
    %116 = vst.msk [vmem:[#allocation7 + $0x6] sm:$0x3] %vm112, %v107
    %117 = vst.msk [vmem:[#allocation7 + $0x8] sm:$0x3] %vm112, %v108
    %118 = vst.msk [vmem:[#allocation7 + $0xa] sm:$0x3] %vm112, %v109
    %119 = vst.msk [vmem:[#allocation7 + $0xc] sm:$0x3] %vm112, %v110
    %120 = vst.msk [vmem:[#allocation7 + $0xe] sm:$0x3] %vm112, %v111
    // Predicated region
    $region18: #{tpu_custom_call.1} parent=1 // pred_check
      _
    $region19: #{tpu_custom_call.1} parent=1 // pred_check_branch
      %122 = sbr.rel (0) target = $region21
    $region20: #{tpu_custom_call.1} parent=1 // pred_region
      %s124 = ssub.s32 256, 256
      %125 = vsyncadd [#allocation4], %s124
      %s126 = sshll.u32 [#allocation7], 4
      %s127 = int_to_ptr.vmem [resolvable:$true] %s126
      %132 = dma.vmem_to_hbm [thread:$0]  %s127, 256, %s2, [#allocation4], 32, 32, 2
    $region21: #{tpu_custom_call.1} parent=1 // pred_fallthru
      _
    // Predicated region
    $region22: #{tpu_custom_call.1} parent=1 // pred_check
      _
    $region23: #{tpu_custom_call.1} parent=1 // pred_check_branch
      %134 = sbr.rel (0) target = $region25
    $region24: #{tpu_custom_call.1} parent=1 // pred_region
      %135 = dma.done [#allocation4], 256
    $region25: #{tpu_custom_call.1} parent=1 // pred_fallthru
      _
    %136 = vsyncpa [#allocation3], 1
    %137 = vsyncpa [#allocation6], 1
    %138 = vsyncpa [#allocation4], 1

</llo_original>
